<compile_context>
chip_gen: v7x
topology: tpu7x:2x2x1
jax: 0.10.0
libtpu: 0.0.40
codegen_flags: <defaults>
</compile_context>

<pallas_src>
import jax
import jax.numpy as jnp
from jax import lax
from jax.experimental import pallas as pl
from jax.experimental.pallas import tpu as pltpu


# ----------------------------------------------------------------------------
# Kernel
# ----------------------------------------------------------------------------
def _critic_kernel(s_ref, a_ref, w1s_ref, w1a_ref, w23_ref, pack_ref, o_ref):
    """Fused 4-layer MLP.  pack_ref rows: [b1, b2, b3, w4_row, b4 @ [4, 0]]."""
    wdt = w1s_ref.dtype                              # weight storage dtype

    s = s_ref[...].astype(wdt)                       # (tB, Ds)
    a = a_ref[...].astype(wdt)                       # (tB, Da)

    b1 = pack_ref[0:1, :].astype(jnp.float32)        # (1, H)
    b2 = pack_ref[1:2, :].astype(jnp.float32)        # (1, H)
    b3 = pack_ref[2:3, :].astype(jnp.float32)        # (1, H)
    w4 = pack_ref[3:4, :].astype(jnp.float32)        # (1, H)  fc_4 weight row
    b4 = pack_ref[4:5, 0:1].astype(jnp.float32)      # (1, 1)

    # Layer 1: torch.cat folded into a split matmul (no concat op, no extra
    # HBM round trip for the concatenated input).
    h = jnp.dot(s, w1s_ref[...], preferred_element_type=jnp.float32)
    h = h + jnp.dot(a, w1a_ref[...], preferred_element_type=jnp.float32)
    h = jnp.maximum(h + b1, 0.0)

    # Layers 2 & 3 (weights stacked in one VMEM-resident slab).
    h = jnp.dot(h.astype(wdt), w23_ref[0], preferred_element_type=jnp.float32)
    h = jnp.maximum(h + b2, 0.0)
    h = jnp.dot(h.astype(wdt), w23_ref[1], preferred_element_type=jnp.float32)
    h = jnp.maximum(h + b3, 0.0)

    # Layer 4 (hidden -> 1): explicit A·Bᵀ contraction ((1,H) x (tB,H) over H)
    # so the lane-dense (1, tB) result is produced without materializing a
    # transpose of the activation tile (per perf review).  This layer is only
    # 2*B*H flops, so it stays f32 even when the weights are bf16.
    q = lax.dot_general(w4, h, (((1,), (1,)), ((), ())),
                        preferred_element_type=jnp.float32)
    o_ref[...] = (q + b4).astype(o_ref.dtype)


# ----------------------------------------------------------------------------
# Single-buffering probe (constant-index weight specs)
# ----------------------------------------------------------------------------
def _probe_single_buffer_support():
    """pl.Buffered(1) on constant-index specs halves resident weight VMEM, but
    single-buffer pipeline_mode support can vary across jax versions; probe a
    tiny kernel once and fall back to default double-buffering if rejected."""
    try:
        def _copy(x_ref, o_ref):
            o_ref[...] = x_ref[...]

        out = pl.pallas_call(
            _copy,
            out_shape=jax.ShapeDtypeStruct((16, 128), jnp.float32),
            grid=(2,),
            in_specs=[pl.BlockSpec((8, 128), lambda i: (0, 0),
                                   pipeline_mode=pl.Buffered(1))],
            out_specs=pl.BlockSpec((8, 128), lambda i: (i, 0)),
        )(jnp.zeros((8, 128), jnp.float32))
        jax.block_until_ready(out)
        return True
    except Exception:                                # pragma: no cover
        return False


_SINGLE_BUFFER_WEIGHTS = _probe_single_buffer_support()


def _weight_spec(block_shape, index_map):
    """Resident (constant-index) weight spec; single-buffered when supported."""
    if _SINGLE_BUFFER_WEIGHTS:
        return pl.BlockSpec(block_shape, index_map,
                            pipeline_mode=pl.Buffered(1))
    return pl.BlockSpec(block_shape, index_map)


# ----------------------------------------------------------------------------
# Tiling heuristics
# ----------------------------------------------------------------------------
def _round_up(x, m):
    return ((x + m - 1) // m) * m


def _pick_batch_tiling(B, H):
    """Return (block_b, padded_B).

    block_b is a multiple of 128 (lane-dense, unmasked (1, block_b) output
    stores); padded_B is a multiple of block_b.  For B > 128 we aim for at
    least 2 grid steps so v7x's two TensorCores both get work under
    dimension_semantics=("parallel",).  The tile is capped at 512 rows when
    H >= 512 so f32 layer intermediates fit v5e's 16 MiB scoped-VMEM default.
    """
    if B <= 128:
        return 128, 128
    cap = 512 if H >= 512 else 1024
    block_b = min(cap, _round_up(pl.cdiv(B, 2), 128))
    return block_b, _round_up(B, block_b)


# ----------------------------------------------------------------------------
# Wrapper
# ----------------------------------------------------------------------------
@jax.jit
def critic_forward(state, action, params):
    """state: (B, state_dim), action: (B, action_dim) -> q_value: (B, 1)."""
    w1s, w1a, w23, pack = params
    B, Ds = state.shape
    Da = action.shape[1]
    H = w1s.shape[1]

    state = state.astype(jnp.float32)
    action = action.astype(jnp.float32)

    block_b, B_pad = _pick_batch_tiling(B, H)
    if B_pad != B:
        pad = B_pad - B
        state = jnp.pad(state, ((0, pad), (0, 0)))
        action = jnp.pad(action, ((0, pad), (0, 0)))
    grid = (B_pad // block_b,)

    # VMEM budget: resident weights (single- or double-buffered), double-
    # buffered activation tiles, lane-dense output tile, f32 intermediates.
    w_bytes = sum(int(p.size) * p.dtype.itemsize for p in (w1s, w1a, w23, pack))
    w_buf = 1 if _SINGLE_BUFFER_WEIGHTS else 2
    act_bytes = 2 * block_b * (Ds + Da) * 4 + 2 * block_b * 4
    scratch_bytes = 6 * block_b * H * 4
    vmem_limit = int(min(max(2 * (w_buf * w_bytes + act_bytes + scratch_bytes),
                             32 * 1024 * 1024),
                         100 * 1024 * 1024))

    flops = 2 * B_pad * (Ds * H + Da * H + 2 * H * H + H)
    bytes_accessed = (state.size + action.size + B_pad) * 4 + w_bytes

    q_row = pl.pallas_call(
        _critic_kernel,
        out_shape=jax.ShapeDtypeStruct((1, B_pad), jnp.float32),
        grid_spec=pltpu.PrefetchScalarGridSpec(
            num_scalar_prefetch=0,
            grid=grid,
            in_specs=[
                pl.BlockSpec((block_b, Ds), lambda i: (i, 0)),   # state tile
                pl.BlockSpec((block_b, Da), lambda i: (i, 0)),   # action tile
                _weight_spec((Ds, H), lambda i: (0, 0)),         # W1_s resident
                _weight_spec((Da, H), lambda i: (0, 0)),         # W1_a resident
                _weight_spec((2, H, H), lambda i: (0, 0, 0)),    # W2, W3 resident
                _weight_spec((5, H), lambda i: (0, 0)),          # biases + W4 row
            ],
            out_specs=pl.BlockSpec((1, block_b), lambda i: (0, i)),
        ),
        compiler_params=pltpu.CompilerParams(
            dimension_semantics=("parallel",),        # v7x megacore sharding
            vmem_limit_bytes=vmem_limit),
        cost_estimate=pl.CostEstimate(
            flops=flops, transcendentals=0, bytes_accessed=bytes_accessed),
    )(state, action, w1s, w1a, w23, pack)

    # TODO(synk): amortize the per-call weight HBM->VMEM DMA across calls
    # (cross-pallas_call weight-resident/future pattern) when the same params
    # are reused in an RL inner loop.

    # Lane-dense (1, B_pad) kernel output -> (B, 1) to match the PyTorch module.
    return q_row.reshape(B_pad, 1)[:B]


# ----------------------------------------------------------------------------
# Parameter init (nn.Linear-style) and pure-JAX reference
# ----------------------------------------------------------------------------
def init_critic_params(key, state_dim, action_dim, hidden_size,
                       param_dtype=jnp.float32):
    """nn.Linear-style init (U[-1/sqrt(fan_in), +1/sqrt(fan_in)]), packed for
    the kernel.  Weights stored transposed: (in_features, out_features).
    param_dtype=jnp.bfloat16 (recommended on v6e/v7x) halves weight DMA bytes
    and runs at native MXU rate; the pack slab (biases, fc_4 row, b4) always
    stays f32 for accuracy."""
    H = hidden_size

    def uniform(k, shape, fan_in):
        bound = 1.0 / (float(fan_in) ** 0.5)
        return jax.random.uniform(k, shape, jnp.float32, -bound, bound)

    keys = jax.random.split(key, 9)
    fan1 = state_dim + action_dim
    w1s = uniform(keys[0], (state_dim, H), fan1)
    w1a = uniform(keys[1], (action_dim, H), fan1)
    b1 = uniform(keys[2], (H,), fan1)
    w2 = uniform(keys[3], (H, H), H)
    b2 = uniform(keys[4], (H,), H)
    w3 = uniform(keys[5], (H, H), H)
    b3 = uniform(keys[6], (H,), H)
    w4 = uniform(keys[7], (H, 1), H)
    b4 = uniform(keys[8], (1,), H)

    w23 = jnp.stack([w2, w3], axis=0)                        # (2, H, H)
    pack = jnp.zeros((5, H), jnp.float32)
    pack = pack.at[0].set(b1).at[1].set(b2).at[2].set(b3)
    pack = pack.at[3].set(w4[:, 0]).at[4, 0].set(b4[0])      # (5, H), kept f32

    return (w1s.astype(param_dtype), w1a.astype(param_dtype),
            w23.astype(param_dtype), pack)


def critic_reference(state, action, params):
    """Pure-JAX reference with the same math as the PyTorch module."""
    w1s, w1a, w23, pack = (p.astype(jnp.float32) for p in params)
    x = jnp.concatenate([state, action], axis=-1).astype(jnp.float32)
    w1 = jnp.concatenate([w1s, w1a], axis=0)
    h = jnp.maximum(x @ w1 + pack[0], 0.0)
    h = jnp.maximum(h @ w23[0] + pack[1], 0.0)
    h = jnp.maximum(h @ w23[1] + pack[2], 0.0)
    return h @ pack[3][:, None] + pack[4, 0]


# ----------------------------------------------------------------------------
# Self-test
# ----------------------------------------------------------------------------
if __name__ == "__main__":
    state_dim, action_dim, hidden_size = 8, 4, 32
    batch = 4

    key = jax.random.PRNGKey(0)
    key, ks, ka, kp = jax.random.split(key, 4)

    state = jax.random.normal(ks, (batch, state_dim), jnp.float32)
    action = jax.random.normal(ka, (batch, action_dim), jnp.float32)

    # f32 weights: exact check against the pure-JAX reference.
    params_f32 = init_critic_params(kp, state_dim, action_dim, hidden_size)
    q = critic_forward(state, action, params_f32)
    jax.block_until_ready(q)
    q_ref = critic_reference(state, action, params_f32)
    assert q.shape == (batch, 1)
    assert jnp.allclose(q, q_ref, atol=1e-5, rtol=1e-5)

    # bf16 weights (recommended path on v6e/v7x): f32 pack slab, loose check.
    params_bf16 = init_critic_params(kp, state_dim, action_dim, hidden_size,
                                     param_dtype=jnp.bfloat16)
    q16 = critic_forward(state, action, params_bf16)
    jax.block_until_ready(q16)
    assert q16.shape == (batch, 1)
    assert bool(jnp.all(jnp.isfinite(q16)))
    assert jnp.allclose(q16, q_ref, atol=1e-1, rtol=1e-1)

    print("KERNEL_OK")
</pallas_src>

<mosaic_0001>
module attributes {stable_mosaic.version = 11 : i64} {
  func.func @_copy(%arg0: i32, %arg1: memref<8x128xf32, #tpu.memory_space<vmem>>, %arg2: memref<8x128xf32, #tpu.memory_space<vmem>>) attributes {dimension_semantics = [#tpu.dimension_semantics<arbitrary>], iteration_bounds = array<i64: 2>, scalar_prefetch = 0 : i64, scratch_operands = 0 : i64, tpu.core_type = #tpu.core_type<tc>, window_params = [{pipeline_mode = #tpu.pipeline_mode<synchronous>, transform_indices = @transform_0, window_bounds = array<i64: 8, 128>}, {transform_indices = @transform_1, window_bounds = array<i64: 8, 128>}]} {
    %c0 = arith.constant 0 : index
    %c0_0 = arith.constant 0 : index
    %0 = vector.load %arg1[%c0, %c0_0] : memref<8x128xf32, #tpu.memory_space<vmem>>, vector<8x128xf32>
    %c0_1 = arith.constant 0 : index
    %c0_2 = arith.constant 0 : index
    %1 = vector.load %arg2[%c0_1, %c0_2] : memref<8x128xf32, #tpu.memory_space<vmem>>, vector<8x128xf32>
    tpu.vector_store %arg2[%c0_1, %c0_2], %0 {strides = array<i32>} : memref<8x128xf32, #tpu.memory_space<vmem>>, vector<8x128xf32>,
    return
  }
  func.func @transform_0(%arg0: i32) -> (i32, i32) {
    %c0_i32 = arith.constant 0 : i32
    %c0_i32_0 = arith.constant 0 : i32
    %c0_i32_1 = arith.constant 0 : i32
    return %c0_i32, %c0_i32_0 : i32, i32
  }
  func.func @transform_1(%arg0: i32) -> (i32, i32) {
    %c0_i32 = arith.constant 0 : i32
    %c0_i32_0 = arith.constant 0 : i32
    return %arg0, %c0_i32 : i32, i32
  }
}

module attributes {stable_mosaic.version = 11 : i64} {
  func.func @_critic_kernel(%arg0: i32, %arg1: memref<128x8xf32, #tpu.memory_space<vmem>>, %arg2: memref<128x4xf32, #tpu.memory_space<vmem>>, %arg3: memref<8x32xf32, #tpu.memory_space<vmem>>, %arg4: memref<4x32xf32, #tpu.memory_space<vmem>>, %arg5: memref<2x32x32xf32, #tpu.memory_space<vmem>>, %arg6: memref<5x32xf32, #tpu.memory_space<vmem>>, %arg7: memref<1x128xf32, #tpu.memory_space<vmem>>) attributes {dimension_semantics = [#tpu.dimension_semantics<parallel>], iteration_bounds = array<i64: 1>, scalar_prefetch = 0 : i64, scratch_operands = 0 : i64, tpu.core_type = #tpu.core_type<tc>, window_params = [{transform_indices = @transform_0, window_bounds = array<i64: 128, 8>}, {transform_indices = @transform_1, window_bounds = array<i64: 128, 4>}, {pipeline_mode = #tpu.pipeline_mode<synchronous>, transform_indices = @transform_2, window_bounds = array<i64: 8, 32>}, {pipeline_mode = #tpu.pipeline_mode<synchronous>, transform_indices = @transform_3, window_bounds = array<i64: 4, 32>}, {pipeline_mode = #tpu.pipeline_mode<synchronous>, transform_indices = @transform_4, window_bounds = array<i64: 2, 32, 32>}, {pipeline_mode = #tpu.pipeline_mode<synchronous>, transform_indices = @transform_5, window_bounds = array<i64: 5, 32>}, {transform_indices = @transform_6, window_bounds = array<i64: 1, 128>}]} {
    %c0 = arith.constant 0 : index
    %c0_0 = arith.constant 0 : index
    %0 = vector.load %arg1[%c0, %c0_0] : memref<128x8xf32, #tpu.memory_space<vmem>>, vector<128x8xf32>
    %c0_1 = arith.constant 0 : index
    %c0_2 = arith.constant 0 : index
    %1 = vector.load %arg2[%c0_1, %c0_2] : memref<128x4xf32, #tpu.memory_space<vmem>>, vector<128x4xf32>
    %c0_3 = arith.constant 0 : index
    %c0_4 = arith.constant 0 : index
    %2 = vector.load %arg6[%c0_3, %c0_4] : memref<5x32xf32, #tpu.memory_space<vmem>>, vector<1x32xf32>
    %c1 = arith.constant 1 : index
    %c0_5 = arith.constant 0 : index
    %3 = vector.load %arg6[%c1, %c0_5] : memref<5x32xf32, #tpu.memory_space<vmem>>, vector<1x32xf32>
    %c2 = arith.constant 2 : index
    %c0_6 = arith.constant 0 : index
    %4 = vector.load %arg6[%c2, %c0_6] : memref<5x32xf32, #tpu.memory_space<vmem>>, vector<1x32xf32>
    %c3 = arith.constant 3 : index
    %c0_7 = arith.constant 0 : index
    %5 = vector.load %arg6[%c3, %c0_7] : memref<5x32xf32, #tpu.memory_space<vmem>>, vector<1x32xf32>
    %c4 = arith.constant 4 : index
    %c0_8 = arith.constant 0 : index
    %6 = vector.load %arg6[%c4, %c0_8] : memref<5x32xf32, #tpu.memory_space<vmem>>, vector<1x1xf32>
    %c0_9 = arith.constant 0 : index
    %c0_10 = arith.constant 0 : index
    %7 = vector.load %arg3[%c0_9, %c0_10] : memref<8x32xf32, #tpu.memory_space<vmem>>, vector<8x32xf32>
    %cst = arith.constant dense<0.000000e+00> : vector<128x32xf32>
    %8 = tpu.matmul %0, %7, %cst {dimension_numbers = #tpu.dot_dimension_numbers<[1], [0], [0], [1], [0, 0, 1, 1], [], []>} : vector<128x8xf32>, vector<8x32xf32>, vector<128x32xf32> -> vector<128x32xf32>
    %c0_11 = arith.constant 0 : index
    %c0_12 = arith.constant 0 : index
    %9 = vector.load %arg4[%c0_11, %c0_12] : memref<4x32xf32, #tpu.memory_space<vmem>>, vector<4x32xf32>
    %cst_13 = arith.constant dense<0.000000e+00> : vector<128x32xf32>
    %10 = tpu.matmul %1, %9, %cst_13 {dimension_numbers = #tpu.dot_dimension_numbers<[1], [0], [0], [1], [0, 0, 1, 1], [], []>} : vector<128x4xf32>, vector<4x32xf32>, vector<128x32xf32> -> vector<128x32xf32>
    %11 = arith.addf %8, %10 : vector<128x32xf32>
    %12 = vector.broadcast %2 : vector<1x32xf32> to vector<128x32xf32>
    %13 = arith.addf %11, %12 : vector<128x32xf32>
    %cst_14 = arith.constant 0.000000e+00 : f32
    %14 = vector.broadcast %cst_14 : f32 to vector<128x32xf32>
    %15 = arith.maximumf %13, %14 : vector<128x32xf32>
    %c0_15 = arith.constant 0 : index
    %c0_16 = arith.constant 0 : index
    %c0_17 = arith.constant 0 : index
    %16 = vector.load %arg5[%c0_15, %c0_16, %c0_17] : memref<2x32x32xf32, #tpu.memory_space<vmem>>, vector<1x32x32xf32>
    %17 = vector.shape_cast %16 : vector<1x32x32xf32> to vector<32x32xf32>
    %cst_18 = arith.constant dense<0.000000e+00> : vector<128x32xf32>
    %18 = tpu.matmul %15, %17, %cst_18 {dimension_numbers = #tpu.dot_dimension_numbers<[1], [0], [0], [1], [0, 0, 1, 1], [], []>} : vector<128x32xf32>, vector<32x32xf32>, vector<128x32xf32> -> vector<128x32xf32>
    %19 = vector.broadcast %3 : vector<1x32xf32> to vector<128x32xf32>
    %20 = arith.addf %18, %19 : vector<128x32xf32>
    %cst_19 = arith.constant 0.000000e+00 : f32
    %21 = vector.broadcast %cst_19 : f32 to vector<128x32xf32>
    %22 = arith.maximumf %20, %21 : vector<128x32xf32>
    %c1_20 = arith.constant 1 : index
    %c0_21 = arith.constant 0 : index
    %c0_22 = arith.constant 0 : index
    %23 = vector.load %arg5[%c1_20, %c0_21, %c0_22] : memref<2x32x32xf32, #tpu.memory_space<vmem>>, vector<1x32x32xf32>
    %24 = vector.shape_cast %23 : vector<1x32x32xf32> to vector<32x32xf32>
    %cst_23 = arith.constant dense<0.000000e+00> : vector<128x32xf32>
    %25 = tpu.matmul %22, %24, %cst_23 {dimension_numbers = #tpu.dot_dimension_numbers<[1], [0], [0], [1], [0, 0, 1, 1], [], []>} : vector<128x32xf32>, vector<32x32xf32>, vector<128x32xf32> -> vector<128x32xf32>
    %26 = vector.broadcast %4 : vector<1x32xf32> to vector<128x32xf32>
    %27 = arith.addf %25, %26 : vector<128x32xf32>
    %cst_24 = arith.constant 0.000000e+00 : f32
    %28 = vector.broadcast %cst_24 : f32 to vector<128x32xf32>
    %29 = arith.maximumf %27, %28 : vector<128x32xf32>
    %cst_25 = arith.constant dense<0.000000e+00> : vector<1x128xf32>
    %30 = tpu.matmul %5, %29, %cst_25 {dimension_numbers = #tpu.dot_dimension_numbers<[1], [1], [0], [0], [0, 0, 1, 0], [], []>} : vector<1x32xf32>, vector<128x32xf32>, vector<1x128xf32> -> vector<1x128xf32>
    %31 = vector.broadcast %6 : vector<1x1xf32> to vector<1x128xf32>
    %32 = arith.addf %30, %31 : vector<1x128xf32>
    %c0_26 = arith.constant 0 : index
    %c0_27 = arith.constant 0 : index
    %33 = vector.load %arg7[%c0_26, %c0_27] : memref<1x128xf32, #tpu.memory_space<vmem>>, vector<1x128xf32>
    tpu.vector_store %arg7[%c0_26, %c0_27], %32 {strides = array<i32>} : memref<1x128xf32, #tpu.memory_space<vmem>>, vector<1x128xf32>,
    return
  }
  func.func @transform_0(%arg0: i32) -> (i32, i32) {
    %c0_i32 = arith.constant 0 : i32
    %c0_i32_0 = arith.constant 0 : i32
    return %arg0, %c0_i32 : i32, i32
  }
  func.func @transform_1(%arg0: i32) -> (i32, i32) {
    %c0_i32 = arith.constant 0 : i32
    %c0_i32_0 = arith.constant 0 : i32
    return %arg0, %c0_i32 : i32, i32
  }
  func.func @transform_2(%arg0: i32) -> (i32, i32) {
    %c0_i32 = arith.constant 0 : i32
    %c0_i32_0 = arith.constant 0 : i32
    %c0_i32_1 = arith.constant 0 : i32
    return %c0_i32, %c0_i32_0 : i32, i32
  }
  func.func @transform_3(%arg0: i32) -> (i32, i32) {
    %c0_i32 = arith.constant 0 : i32
    %c0_i32_0 = arith.constant 0 : i32
    %c0_i32_1 = arith.constant 0 : i32
    return %c0_i32, %c0_i32_0 : i32, i32
  }
  func.func @transform_4(%arg0: i32) -> (i32, i32, i32) {
    %c0_i32 = arith.constant 0 : i32
    %c0_i32_0 = arith.constant 0 : i32
    %c0_i32_1 = arith.constant 0 : i32
    %c0_i32_2 = arith.constant 0 : i32
    return %c0_i32, %c0_i32_0, %c0_i32_1 : i32, i32, i32
  }
  func.func @transform_5(%arg0: i32) -> (i32, i32) {
    %c0_i32 = arith.constant 0 : i32
    %c0_i32_0 = arith.constant 0 : i32
    %c0_i32_1 = arith.constant 0 : i32
    return %c0_i32, %c0_i32_0 : i32, i32
  }
  func.func @transform_6(%arg0: i32) -> (i32, i32) {
    %c0_i32 = arith.constant 0 : i32
    %c0_i32_0 = arith.constant 0 : i32
    return %c0_i32, %arg0 : i32, i32
  }
}

</mosaic_0001>

<llo_original>
// kernel: tpu_custom_call.1
$region0: #{tpu_custom_call.1}
  #allocation0 [shape = 'u32[]', space=smem, size = 0x4, offset = 0x4, fixed_abs, tag = 'smem constant byte address 0x4 - core index']
  #allocation1 [shape = 'u32[144,128]{1,0:T(1,128)}', space=vmem, size = 0x12000, scoped, tag = 'internal scratch']
  %s0 = inlined_call_operand.hbm [shape: f32[8,128], index: 0, kind: input, shape index: {}]
  %s1 = inlined_call_operand.hbm [shape: f32[16,128], index: 1, kind: output, shape index: {}]
  %s2 = sld [smem:[#allocation0]]
  $region41: #{tpu_custom_call.1} parent=0
    _
  %s4 = ssub.s32 1, %s2
  %s5 = scalar_select 0, %s4, %s2
  $region1: #{tpu_custom_call.1} parent=0
    #allocation2 [shape = 'u8[4096]{0}', space=vmem, size = 0x1000, scoped, tag = 'input window, operand 0, single buffered']
    #allocation3 [shape = 's32[2]{0}', space=sflag, size = 0x8, scoped, tag = 'scoped memory for tpu_custom_call.1']
    #allocation4 [shape = 's32[2]{0}', space=sflag, size = 0x8, scoped, tag = 'scoped memory for tpu_custom_call.1']
    #allocation5 [shape = 'u8[8192]{0}', space=vmem, size = 0x2000, scoped, tag = 'output window, operand 0']
    %6 = vsyncpa [#allocation3], 0
    %7 = vsyncpa [#allocation4], 0
    %s8 = scalar_lea.sflag [#allocation4], 1
    %9 = vsyncpa %s8, 0
    loop: start=0, step=1, limit=4
    $region2: #{tpu_custom_call.1} parent=1 // loop_pre_header
      _
    $region3: #{tpu_custom_call.1} parent=1 // loop_header
      %s11 = sphi 0, %s15
      %p12 = scmp.ge.s32.totalorder %s11, 4
      %s19 = sphi 0, %s19
      %s21 = sphi 0, %s19
      %s22 = sphi 0, %s21
      %s36 = sphi 0, %s22
      %s42 = sphi 0, %s44
      %s45 = sphi 0, %s42
      %s46 = sphi 0, %s45
      %s62 = sphi 0, %s46
    $region4: #{tpu_custom_call.1} parent=1 // loop_header_branch
      %14 = sbr.rel (%p12) target = $region8
    $region5: #{tpu_custom_call.1} parent=1 // loop_body
      %s16 = ssub.s32 %s11, 1
      %s17 = ssub.s32 %s11, 2
      %s18 = sadd.s32 %s11, 1
      %s20 = sadd.s32 %s19, 1
      %p23 = scmp.eq.s32.totalorder %s11, 1
      %p24 = scmp.ne.s32.totalorder %s19, %s21
      %p25 = scmp.eq.s32.totalorder %s11, 0
      %p26 = por %p24, %p25
      %p27 = scmp.ne.s32.totalorder %s19, %s21
      %p28 = scmp.eq.s32.totalorder %s16, 1
      %p29 = por %p27, %p28
      %p30 = scmp.ne.s32.totalorder %s21, %s22
      %p31 = scmp.eq.s32.totalorder %s16, 0
      %p32 = por %p30, %p31
      %p33 = scmp.ne.s32.totalorder %s21, %s22
      %p34 = scmp.eq.s32.totalorder %s17, 1
      %p35 = por %p33, %p34
      %p37 = scmp.ne.s32.totalorder %s22, %s36
      %p38 = scmp.eq.s32.totalorder %s17, 0
      %p39 = por %p37, %p38
      %s40 = ssub.s32 %s11, %s18
      %p41 = scmp.eq.s32.totalorder %s40, 0
      %s43 = sadd.s32 %s42, 1
      %s44 = scalar_select %p41, %s42, %s43
      %p47 = pneg %p41
      %p48 = scmp.eq.s32.totalorder %s11, 1
      %p49 = por %p47, %p48
      %p50 = scmp.ne.s32.totalorder %s42, %s45
      %p51 = scmp.eq.s32.totalorder %s11, 0
      %p52 = por %p50, %p51
      %p53 = scmp.ne.s32.totalorder %s42, %s45
      %p54 = scmp.eq.s32.totalorder %s16, 1
      %p55 = por %p53, %p54
      %p56 = scmp.ne.s32.totalorder %s45, %s46
      %p57 = scmp.eq.s32.totalorder %s16, 0
      %p58 = por %p56, %p57
      %p59 = scmp.ne.s32.totalorder %s45, %s46
      %p60 = scmp.eq.s32.totalorder %s17, 1
      %p61 = por %p59, %p60
      %p63 = scmp.ne.s32.totalorder %s46, %s62
      %p64 = scmp.eq.s32.totalorder %s17, 0
      %p65 = por %p63, %p64
      %p66 = scmp.le.s32.totalorder 1, %s11
      %p67 = scmp.lt.s32.totalorder %s11, 3
      %p68 = pnand %p66, %p67
      %p69 = pneg %p68
      // Predicated region
      $region9: #{tpu_custom_call.1} parent=5 // pred_check
        _
      $region10: #{tpu_custom_call.1} parent=5 // pred_check_branch
        %71 = sbr.rel (%p68) target = $region12
      $region11: #{tpu_custom_call.1} parent=5 // pred_region
        %s72 = ssub.s32 %s11, 1
        // Predicated region
        $region13: #{tpu_custom_call.1} parent=11 // pred_check
          %p73 = pneg %p32
        $region14: #{tpu_custom_call.1} parent=11 // pred_check_branch
          %75 = sbr.rel (%p73) target = $region16
        $region15: #{tpu_custom_call.1} parent=11 // pred_region
          %s77 = ssub.s32 128, 128
          %78 = vsyncadd [#allocation3], %s77
          %s80 = sshll.u32 [#allocation2], 4
          %s81 = int_to_ptr.vmem [resolvable:$true] %s80
          %83 = dma.hbm_to_vmem [thread:$0]  %s0, 128, %s81, [#allocation3]
        $region16: #{tpu_custom_call.1} parent=11 // pred_fallthru
          _
      $region12: #{tpu_custom_call.1} parent=5 // pred_fallthru
        _
      %p84 = scmp.lt.s32.totalorder %s11, 2
      // Predicated region
      $region17: #{tpu_custom_call.1} parent=5 // pred_check
        %p85 = pneg %p84
      $region18: #{tpu_custom_call.1} parent=5 // pred_check_branch
        %87 = sbr.rel (%p85) target = $region20
      $region19: #{tpu_custom_call.1} parent=5 // pred_region
        _
      $region20: #{tpu_custom_call.1} parent=5 // pred_fallthru
        _
      %p88 = scmp.le.s32.totalorder 1, %s11
      %p89 = scmp.lt.s32.totalorder %s11, 3
      %p90 = pnand %p88, %p89
      %p91 = pneg %p90
      // Predicated region
      $region21: #{tpu_custom_call.1} parent=5 // pred_check
        _
      $region22: #{tpu_custom_call.1} parent=5 // pred_check_branch
        %93 = sbr.rel (%p90) target = $region24
      $region23: #{tpu_custom_call.1} parent=5 // pred_region
        %s94 = ssub.s32 %s11, 1
        // Predicated region
        $region25: #{tpu_custom_call.1} parent=23 // pred_check
          %p95 = pneg %p32
        $region26: #{tpu_custom_call.1} parent=23 // pred_check_branch
          %97 = sbr.rel (%p95) target = $region28
        $region27: #{tpu_custom_call.1} parent=23 // pred_region
          %98 = dma.done [#allocation3], 128
        $region28: #{tpu_custom_call.1} parent=23 // pred_fallthru
          _
        %p99 = pneg %p32
        %p100 = pneg %p29
        %p101 = pneg %p58
        %p102 = pneg %p55
        %s103 = sand.u32 %s45, 1
        %s104 = scalar_lea.sflag [#allocation4], %s103
        %s105 = sand.u32 %s45, 1
        %s106 = smul.addr %s105, 8
        %s107 = scalar_lea.vmem [#allocation5], %s106
        %v108 = vld [vmem:[#allocation2] sm:$0xff]
        %109 = vst [vmem:[%s107] sm:$0xff] %v108
        %s110 = sand.u32 %s45, 1
        %s111 = scalar_lea.sflag [#allocation4], %s110
        %s112 = sand.u32 %s45, 1
        %s113 = smul.addr %s112, 8
        %s114 = scalar_lea.vmem [#allocation5], %s113
        // Predicated region
        $region29: #{tpu_custom_call.1} parent=23 // pred_check
          %p115 = pneg %p55
        $region30: #{tpu_custom_call.1} parent=23 // pred_check_branch
          %117 = sbr.rel (%p115) target = $region32
        $region31: #{tpu_custom_call.1} parent=23 // pred_region
          %s119 = ssub.s32 128, 128
          %120 = vsyncadd %s111, %s119
          %s121 = smul.addr %s16, 128
          %s122 = scalar_lea.hbm %s1, %s121
          %s124 = sshll.u32 %s114, 4
          %s125 = int_to_ptr.vmem [resolvable:$true] %s124
          %127 = dma.vmem_to_hbm [thread:$0]  %s125, 128, %s122, %s111
        $region32: #{tpu_custom_call.1} parent=23 // pred_fallthru
          _
      $region24: #{tpu_custom_call.1} parent=5 // pred_fallthru
        _
      %p128 = scmp.le.s32.totalorder 2, %s11
      // Predicated region
      $region33: #{tpu_custom_call.1} parent=5 // pred_check
        %p129 = pneg %p128
      $region34: #{tpu_custom_call.1} parent=5 // pred_check_branch
        %131 = sbr.rel (%p129) target = $region36
      $region35: #{tpu_custom_call.1} parent=5 // pred_region
        %s132 = ssub.s32 %s11, 2
        // Predicated region
        $region37: #{tpu_custom_call.1} parent=35 // pred_check
          %p133 = pneg %p61
        $region38: #{tpu_custom_call.1} parent=35 // pred_check_branch
          %135 = sbr.rel (%p133) target = $region40
        $region39: #{tpu_custom_call.1} parent=35 // pred_region
          %s136 = sand.u32 %s46, 1
          %s137 = scalar_lea.sflag [#allocation4], %s136
          %s138 = sand.u32 %s46, 1
          %s139 = smul.addr %s138, 8
          %s140 = scalar_lea.vmem [#allocation5], %s139
          %141 = dma.done %s137, 128
        $region40: #{tpu_custom_call.1} parent=35 // pred_fallthru
          _
      $region36: #{tpu_custom_call.1} parent=5 // pred_fallthru
        _
    $region6: #{tpu_custom_call.1} parent=1 // loop_footer
      %s15 = sadd.s32 1, %s11
    $region7: #{tpu_custom_call.1} parent=1 // loop_footer_branch
      %10 = sbr.rel target = $region3
    $region8: #{tpu_custom_call.1} parent=1 // loop_exit
      _
    %142 = vsyncpa [#allocation3], 1
    %s143 = scalar_lea.sflag [#allocation3], 1
    %144 = vsyncpa %s143, 1
    %145 = vsyncpa [#allocation4], 1
    %s146 = scalar_lea.sflag [#allocation4], 1
    %147 = vsyncpa %s146, 1

// kernel: critic_forward.1
$region0: #{critic_forward.1}
  #allocation0 [shape = 'u32[]', space=smem, size = 0x4, offset = 0x4, fixed_abs, tag = 'smem constant byte address 0x4 - core index']
  #allocation1 [shape = 'u32[144,128]{1,0:T(1,128)}', space=vmem, size = 0x12000, scoped, tag = 'internal scratch']
  %s0 = inlined_call_operand.vmem [shape: f32[128,8], index: 0, kind: input, shape index: {}]
  %s1 = inlined_call_operand.vmem [shape: f32[128,4], index: 1, kind: input, shape index: {}]
  %s2 = inlined_call_operand.vmem [shape: f32[8,32], index: 2, kind: input, shape index: {}]
  %s3 = inlined_call_operand.vmem [shape: f32[4,32], index: 3, kind: input, shape index: {}]
  %s4 = inlined_call_operand.vmem [shape: f32[2,32,32], index: 4, kind: input, shape index: {}]
  %s5 = inlined_call_operand.vmem [shape: f32[5,32], index: 5, kind: input, shape index: {}]
  %s6 = inlined_call_operand.vmem [shape: f32[1,128], index: 6, kind: output, shape index: {}]
  %s7 = sld [smem:[#allocation0]]
  $region34: #{critic_forward.1} parent=0
    _
  %s9 = ssub.s32 1, %s7
  %s10 = scalar_select 0, %s9, %s7
  // Predicated region
  $region2: #{critic_forward.1} parent=0 // pred_check
    _
  $region3: #{critic_forward.1} parent=0 // pred_check_branch
    %12 = sbr.rel (0) target = $region5
  $region4: #{critic_forward.1} parent=0 // pred_region
    _
  $region5: #{critic_forward.1} parent=0 // pred_fallthru
    _
  // Predicated region
  $region6: #{critic_forward.1} parent=0 // pred_check
    _
  $region7: #{critic_forward.1} parent=0 // pred_check_branch
    %14 = sbr.rel (0) target = $region9
  $region8: #{critic_forward.1} parent=0 // pred_region
    _
  $region9: #{critic_forward.1} parent=0 // pred_fallthru
    _
  // Predicated region
  $region10: #{critic_forward.1} parent=0 // pred_check
    _
  $region11: #{critic_forward.1} parent=0 // pred_check_branch
    %16 = sbr.rel (0) target = $region13
  $region12: #{critic_forward.1} parent=0 // pred_region
    _
  $region13: #{critic_forward.1} parent=0 // pred_fallthru
    _
  // Predicated region
  $region14: #{critic_forward.1} parent=0 // pred_check
    _
  $region15: #{critic_forward.1} parent=0 // pred_check_branch
    %18 = sbr.rel (0) target = $region17
  $region16: #{critic_forward.1} parent=0 // pred_region
    _
  $region17: #{critic_forward.1} parent=0 // pred_fallthru
    _
  // Predicated region
  $region18: #{critic_forward.1} parent=0 // pred_check
    _
  $region19: #{critic_forward.1} parent=0 // pred_check_branch
    %20 = sbr.rel (0) target = $region21
  $region20: #{critic_forward.1} parent=0 // pred_region
    _
  $region21: #{critic_forward.1} parent=0 // pred_fallthru
    _
  // Predicated region
  $region22: #{critic_forward.1} parent=0 // pred_check
    _
  $region23: #{critic_forward.1} parent=0 // pred_check_branch
    %22 = sbr.rel (0) target = $region25
  $region24: #{critic_forward.1} parent=0 // pred_region
    _
  $region25: #{critic_forward.1} parent=0 // pred_fallthru
    _
  %v23 = vld [vmem:[%s0] sm:$0xff]
  %v24 = vld [vmem:[%s0 + $0x8] sm:$0xff]
  %v25 = vld [vmem:[%s0 + $0x10] sm:$0xff]
  %v26 = vld [vmem:[%s0 + $0x18] sm:$0xff]
  %v27 = vld [vmem:[%s0 + $0x20] sm:$0xff]
  %v28 = vld [vmem:[%s0 + $0x28] sm:$0xff]
  %v29 = vld [vmem:[%s0 + $0x30] sm:$0xff]
  %v30 = vld [vmem:[%s0 + $0x38] sm:$0xff]
  %v31 = vld [vmem:[%s0 + $0x40] sm:$0xff]
  %v32 = vld [vmem:[%s0 + $0x48] sm:$0xff]
  %v33 = vld [vmem:[%s0 + $0x50] sm:$0xff]
  %v34 = vld [vmem:[%s0 + $0x58] sm:$0xff]
  %v35 = vld [vmem:[%s0 + $0x60] sm:$0xff]
  %v36 = vld [vmem:[%s0 + $0x68] sm:$0xff]
  %v37 = vld [vmem:[%s0 + $0x70] sm:$0xff]
  %v38 = vld [vmem:[%s0 + $0x78] sm:$0xff]
  %v39 = vld [vmem:[%s1] sm:$0xff]
  %v40 = vld [vmem:[%s1 + $0x8] sm:$0xff]
  %v41 = vld [vmem:[%s1 + $0x10] sm:$0xff]
  %v42 = vld [vmem:[%s1 + $0x18] sm:$0xff]
  %v43 = vld [vmem:[%s1 + $0x20] sm:$0xff]
  %v44 = vld [vmem:[%s1 + $0x28] sm:$0xff]
  %v45 = vld [vmem:[%s1 + $0x30] sm:$0xff]
  %v46 = vld [vmem:[%s1 + $0x38] sm:$0xff]
  %v47 = vld [vmem:[%s1 + $0x40] sm:$0xff]
  %v48 = vld [vmem:[%s1 + $0x48] sm:$0xff]
  %v49 = vld [vmem:[%s1 + $0x50] sm:$0xff]
  %v50 = vld [vmem:[%s1 + $0x58] sm:$0xff]
  %v51 = vld [vmem:[%s1 + $0x60] sm:$0xff]
  %v52 = vld [vmem:[%s1 + $0x68] sm:$0xff]
  %v53 = vld [vmem:[%s1 + $0x70] sm:$0xff]
  %v54 = vld [vmem:[%s1 + $0x78] sm:$0xff]
  %v55 = vld [vmem:[%s5] sm:$0x1]
  %v56 = vld [vmem:[%s5 + $0x1] sm:$0x1]
  %v57 = vld [vmem:[%s5 + $0x2] sm:$0x1]
  %v58 = vld [vmem:[%s5 + $0x3] sm:$0x1]
  %v59 = vld [vmem:[%s5 + $0x4] sm:$0x1]
  %v60 = vld [vmem:[%s2] sm:$0xff]
  %v61 = vld [vmem:[%s3] sm:$0xf]
  %vm62 = vcmask 31744
  %v64 = vsel %vm62, %v39, 0
  %v67 = vsel %vm62, %v40, 0
  %v70 = vsel %vm62, %v41, 0
  %v73 = vsel %vm62, %v42, 0
  %v76 = vsel %vm62, %v43, 0
  %v79 = vsel %vm62, %v44, 0
  %v82 = vsel %vm62, %v45, 0
  %v85 = vsel %vm62, %v46, 0
  %v88 = vsel %vm62, %v47, 0
  %v91 = vsel %vm62, %v48, 0
  %v94 = vsel %vm62, %v49, 0
  %v97 = vsel %vm62, %v50, 0
  %v100 = vsel %vm62, %v51, 0
  %v103 = vsel %vm62, %v52, 0
  %v106 = vsel %vm62, %v53, 0
  %v109 = vsel %vm62, %v54, 0
  %vm111 = vcmask 1043456
  %v113 = vsel %vm111, %v61, 0
  %115 = vmatprep.subr.mxu0 0.0
  %116 = vmatpush1.msra.mxu0 %v113
  %117 = vmatprep.subr.mxu0 0.0
  %118 = vmatpush1.msra.mxu0 0.0
  %119 = vmatprep.subr.mxu0 0.0
  %120 = vmatpush1.msra.mxu0 0.0
  %121 = vmatprep.subr.mxu0 0.0
  %122 = vmatpush1.msra.mxu0 0.0
  %123 = vmatprep.subr.mxu0 0.0
  %124 = vmatpush1.msra.mxu0 0.0
  %125 = vmatprep.subr.mxu0 0.0
  %126 = vmatpush1.msra.mxu0 0.0
  %127 = vmatprep.subr.mxu0 0.0
  %128 = vmatpush1.msra.mxu0 0.0
  %129 = vmatprep.subr.mxu0 0.0
  %130 = vmatpush1.msra.mxu0 0.0
  %131 = vmatprep.subr.mxu0 0.0
  %132 = vmatpush1.msra.mxu0 0.0
  %133 = vmatprep.subr.mxu0 0.0
  %134 = vmatpush1.msra.mxu0 0.0
  %135 = vmatprep.subr.mxu0 0.0
  %136 = vmatpush1.msra.mxu0 0.0
  %137 = vmatprep.subr.mxu0 0.0
  %138 = vmatpush1.msra.mxu0 0.0
  %139 = vmatprep.subr.mxu0 0.0
  %140 = vmatpush1.msra.mxu0 0.0
  %141 = vmatprep.subr.mxu0 0.0
  %142 = vmatpush1.msra.mxu0 0.0
  %143 = vmatprep.subr.mxu0 0.0
  %144 = vmatpush1.msra.mxu0 0.0
  %145 = vmatprep.subr.mxu0 0.0
  %146 = vmatpush1.msra.mxu0 0.0
  %147 = vmatprep.subr.mxu0 0.0
  %148 = vmatpush1.msra.mxu0 0.0
  %149 = vmatprep.subr.mxu0 0.0
  %150 = vmatpush1.msra.mxu0 0.0
  %151 = vmatprep.subr.mxu0 0.0
  %152 = vmatpush1.msra.mxu0 0.0
  %153 = vmatprep.subr.mxu0 0.0
  %154 = vmatpush1.msra.mxu0 0.0
  %155 = vmatprep.subr.mxu0 0.0
  %156 = vmatpush1.msra.mxu0 0.0
  %157 = vmatprep.subr.mxu0 0.0
  %158 = vmatpush1.msra.mxu0 0.0
  %159 = vmatprep.subr.mxu0 0.0
  %160 = vmatpush1.msra.mxu0 0.0
  %161 = vmatprep.subr.mxu0 0.0
  %162 = vmatpush1.msra.mxu0 0.0
  %163 = vmatprep.subr.mxu0 0.0
  %164 = vmatpush1.msra.mxu0 0.0
  %165 = vmatprep.subr.mxu0 0.0
  %166 = vmatpush1.msra.mxu0 0.0
  %167 = vmatprep.subr.mxu0 0.0
  %168 = vmatpush1.msra.mxu0 0.0
  %169 = vmatprep.subr.mxu0 0.0
  %170 = vmatpush1.msra.mxu0 0.0
  %171 = vmatprep.subr.mxu0 0.0
  %172 = vmatpush1.msra.mxu0 0.0
  %173 = vmatprep.subr.mxu0 0.0
  %174 = vmatpush1.msra.mxu0 0.0
  %175 = vmatprep.subr.mxu0 0.0
  %176 = vmatpush1.msra.mxu0 0.0
  %177 = vmatprep.subr.mxu0 0.0
  %178 = vmatpush1.msra.mxu0 0.0
  %179 = vmatprep.mubr.f32.mxu0 0.0
  %180 = vmatmul.mubr.f32.gmra.mrb[0].mxu0 %v64
  %v181 = vpop.f32.mrb[0].mxu0
  %v182 = vadd.f32 0.0, %v181
  %v183 = vpop.f32.mrb[0].mxu0
  %184 = vmatprep.mubr.f32.mxu0 0.0
  %185 = vmatmul.mubr.f32.gmra.mrb[0].mxu0 %v67
  %v186 = vpop.f32.mrb[0].mxu0
  %v187 = vadd.f32 0.0, %v186
  %v188 = vpop.f32.mrb[0].mxu0
  %189 = vmatprep.mubr.f32.mxu0 0.0
  %190 = vmatmul.mubr.f32.gmra.mrb[0].mxu0 %v70
  %v191 = vpop.f32.mrb[0].mxu0
  %v192 = vadd.f32 0.0, %v191
  %v193 = vpop.f32.mrb[0].mxu0
  %194 = vmatprep.mubr.f32.mxu0 0.0
  %195 = vmatmul.mubr.f32.gmra.mrb[0].mxu0 %v73
  %v196 = vpop.f32.mrb[0].mxu0
  %v197 = vadd.f32 0.0, %v196
  %v198 = vpop.f32.mrb[0].mxu0
  %199 = vmatprep.mubr.f32.mxu0 0.0
  %200 = vmatmul.mubr.f32.gmra.mrb[0].mxu0 %v76
  %v201 = vpop.f32.mrb[0].mxu0
  %v202 = vadd.f32 0.0, %v201
  %v203 = vpop.f32.mrb[0].mxu0
  %204 = vmatprep.mubr.f32.mxu0 0.0
  %205 = vmatmul.mubr.f32.gmra.mrb[0].mxu0 %v79
  %v206 = vpop.f32.mrb[0].mxu0
  %v207 = vadd.f32 0.0, %v206
  %v208 = vpop.f32.mrb[0].mxu0
  %209 = vmatprep.mubr.f32.mxu0 0.0
  %210 = vmatmul.mubr.f32.gmra.mrb[0].mxu0 %v82
  %v211 = vpop.f32.mrb[0].mxu0
  %v212 = vadd.f32 0.0, %v211
  %v213 = vpop.f32.mrb[0].mxu0
  %214 = vmatprep.mubr.f32.mxu0 0.0
  %215 = vmatmul.mubr.f32.gmra.mrb[0].mxu0 %v85
  %v216 = vpop.f32.mrb[0].mxu0
  %v217 = vadd.f32 0.0, %v216
  %v218 = vpop.f32.mrb[0].mxu0
  %219 = vmatprep.mubr.f32.mxu0 0.0
  %220 = vmatmul.mubr.f32.gmra.mrb[0].mxu0 %v88
  %v221 = vpop.f32.mrb[0].mxu0
  %v222 = vadd.f32 0.0, %v221
  %v223 = vpop.f32.mrb[0].mxu0
  %224 = vmatprep.mubr.f32.mxu0 0.0
  %225 = vmatmul.mubr.f32.gmra.mrb[0].mxu0 %v91
  %v226 = vpop.f32.mrb[0].mxu0
  %v227 = vadd.f32 0.0, %v226
  %v228 = vpop.f32.mrb[0].mxu0
  %229 = vmatprep.mubr.f32.mxu0 0.0
  %230 = vmatmul.mubr.f32.gmra.mrb[0].mxu0 %v94
  %v231 = vpop.f32.mrb[0].mxu0
  %v232 = vadd.f32 0.0, %v231
  %v233 = vpop.f32.mrb[0].mxu0
  %234 = vmatprep.mubr.f32.mxu0 0.0
  %235 = vmatmul.mubr.f32.gmra.mrb[0].mxu0 %v97
  %v236 = vpop.f32.mrb[0].mxu0
  %v237 = vadd.f32 0.0, %v236
  %v238 = vpop.f32.mrb[0].mxu0
  %239 = vmatprep.mubr.f32.mxu0 0.0
  %240 = vmatmul.mubr.f32.gmra.mrb[0].mxu0 %v100
  %v241 = vpop.f32.mrb[0].mxu0
  %v242 = vadd.f32 0.0, %v241
  %v243 = vpop.f32.mrb[0].mxu0
  %244 = vmatprep.mubr.f32.mxu0 0.0
  %245 = vmatmul.mubr.f32.gmra.mrb[0].mxu0 %v103
  %v246 = vpop.f32.mrb[0].mxu0
  %v247 = vadd.f32 0.0, %v246
  %v248 = vpop.f32.mrb[0].mxu0
  %249 = vmatprep.mubr.f32.mxu0 0.0
  %250 = vmatmul.mubr.f32.gmra.mrb[0].mxu0 %v106
  %v251 = vpop.f32.mrb[0].mxu0
  %v252 = vadd.f32 0.0, %v251
  %v253 = vpop.f32.mrb[0].mxu0
  %254 = vmatprep.mubr.f32.mxu0 0.0
  %255 = vmatmul.mubr.f32.gmra.mrb[0].mxu0 %v109
  %v256 = vpop.f32.mrb[0].mxu0
  %v257 = vadd.f32 0.0, %v256
  %v258 = vpop.f32.mrb[0].mxu0
  %259 = vdwg.mxu0
  %vm260 = vcmask 64512
  %v262 = vsel %vm260, %v23, 0
  %v265 = vsel %vm260, %v24, 0
  %v268 = vsel %vm260, %v25, 0
  %v271 = vsel %vm260, %v26, 0
  %v274 = vsel %vm260, %v27, 0
  %v277 = vsel %vm260, %v28, 0
  %v280 = vsel %vm260, %v29, 0
  %v283 = vsel %vm260, %v30, 0
  %v286 = vsel %vm260, %v31, 0
  %v289 = vsel %vm260, %v32, 0
  %v292 = vsel %vm260, %v33, 0
  %v295 = vsel %vm260, %v34, 0
  %v298 = vsel %vm260, %v35, 0
  %v301 = vsel %vm260, %v36, 0
  %v304 = vsel %vm260, %v37, 0
  %v307 = vsel %vm260, %v38, 0
  %309 = vmatprep.subr.mxu0 0.0
  %310 = vmatpush1.msra.mxu0 %v60
  %311 = vmatprep.subr.mxu0 0.0
  %312 = vmatpush1.msra.mxu0 0.0
  %313 = vmatprep.subr.mxu0 0.0
  %314 = vmatpush1.msra.mxu0 0.0
  %315 = vmatprep.subr.mxu0 0.0
  %316 = vmatpush1.msra.mxu0 0.0
  %317 = vmatprep.subr.mxu0 0.0
  %318 = vmatpush1.msra.mxu0 0.0
  %319 = vmatprep.subr.mxu0 0.0
  %320 = vmatpush1.msra.mxu0 0.0
  %321 = vmatprep.subr.mxu0 0.0
  %322 = vmatpush1.msra.mxu0 0.0
  %323 = vmatprep.subr.mxu0 0.0
  %324 = vmatpush1.msra.mxu0 0.0
  %325 = vmatprep.subr.mxu0 0.0
  %326 = vmatpush1.msra.mxu0 0.0
  %327 = vmatprep.subr.mxu0 0.0
  %328 = vmatpush1.msra.mxu0 0.0
  %329 = vmatprep.subr.mxu0 0.0
  %330 = vmatpush1.msra.mxu0 0.0
  %331 = vmatprep.subr.mxu0 0.0
  %332 = vmatpush1.msra.mxu0 0.0
  %333 = vmatprep.subr.mxu0 0.0
  %334 = vmatpush1.msra.mxu0 0.0
  %335 = vmatprep.subr.mxu0 0.0
  %336 = vmatpush1.msra.mxu0 0.0
  %337 = vmatprep.subr.mxu0 0.0
  %338 = vmatpush1.msra.mxu0 0.0
  %339 = vmatprep.subr.mxu0 0.0
  %340 = vmatpush1.msra.mxu0 0.0
  %341 = vmatprep.subr.mxu0 0.0
  %342 = vmatpush1.msra.mxu0 0.0
  %343 = vmatprep.subr.mxu0 0.0
  %344 = vmatpush1.msra.mxu0 0.0
  %345 = vmatprep.subr.mxu0 0.0
  %346 = vmatpush1.msra.mxu0 0.0
  %347 = vmatprep.subr.mxu0 0.0
  %348 = vmatpush1.msra.mxu0 0.0
  %349 = vmatprep.subr.mxu0 0.0
  %350 = vmatpush1.msra.mxu0 0.0
  %351 = vmatprep.subr.mxu0 0.0
  %352 = vmatpush1.msra.mxu0 0.0
  %353 = vmatprep.subr.mxu0 0.0
  %354 = vmatpush1.msra.mxu0 0.0
  %355 = vmatprep.subr.mxu0 0.0
  %356 = vmatpush1.msra.mxu0 0.0
  %357 = vmatprep.subr.mxu0 0.0
  %358 = vmatpush1.msra.mxu0 0.0
  %359 = vmatprep.subr.mxu0 0.0
  %360 = vmatpush1.msra.mxu0 0.0
  %361 = vmatprep.subr.mxu0 0.0
  %362 = vmatpush1.msra.mxu0 0.0
  %363 = vmatprep.subr.mxu0 0.0
  %364 = vmatpush1.msra.mxu0 0.0
  %365 = vmatprep.subr.mxu0 0.0
  %366 = vmatpush1.msra.mxu0 0.0
  %367 = vmatprep.subr.mxu0 0.0
  %368 = vmatpush1.msra.mxu0 0.0
  %369 = vmatprep.subr.mxu0 0.0
  %370 = vmatpush1.msra.mxu0 0.0
  %371 = vmatprep.subr.mxu0 0.0
  %372 = vmatpush1.msra.mxu0 0.0
  %373 = vmatprep.mubr.f32.mxu0 0.0
  %374 = vmatmul.mubr.f32.gmra.mrb[0].mxu0 %v262
  %v375 = vpop.f32.mrb[0].mxu0
  %v376 = vadd.f32 %v182, %v375
  %v377 = vpop.f32.mrb[0].mxu0
  %378 = vmatprep.mubr.f32.mxu0 0.0
  %379 = vmatmul.mubr.f32.gmra.mrb[0].mxu0 %v265
  %v380 = vpop.f32.mrb[0].mxu0
  %v381 = vadd.f32 %v187, %v380
  %v382 = vpop.f32.mrb[0].mxu0
  %383 = vmatprep.mubr.f32.mxu0 0.0
  %384 = vmatmul.mubr.f32.gmra.mrb[0].mxu0 %v268
  %v385 = vpop.f32.mrb[0].mxu0
  %v386 = vadd.f32 %v192, %v385
  %v387 = vpop.f32.mrb[0].mxu0
  %388 = vmatprep.mubr.f32.mxu0 0.0
  %389 = vmatmul.mubr.f32.gmra.mrb[0].mxu0 %v271
  %v390 = vpop.f32.mrb[0].mxu0
  %v391 = vadd.f32 %v197, %v390
  %v392 = vpop.f32.mrb[0].mxu0
  %393 = vmatprep.mubr.f32.mxu0 0.0
  %394 = vmatmul.mubr.f32.gmra.mrb[0].mxu0 %v274
  %v395 = vpop.f32.mrb[0].mxu0
  %v396 = vadd.f32 %v202, %v395
  %v397 = vpop.f32.mrb[0].mxu0
  %398 = vmatprep.mubr.f32.mxu0 0.0
  %399 = vmatmul.mubr.f32.gmra.mrb[0].mxu0 %v277
  %v400 = vpop.f32.mrb[0].mxu0
  %v401 = vadd.f32 %v207, %v400
  %v402 = vpop.f32.mrb[0].mxu0
  %403 = vmatprep.mubr.f32.mxu0 0.0
  %404 = vmatmul.mubr.f32.gmra.mrb[0].mxu0 %v280
  %v405 = vpop.f32.mrb[0].mxu0
  %v406 = vadd.f32 %v212, %v405
  %v407 = vpop.f32.mrb[0].mxu0
  %408 = vmatprep.mubr.f32.mxu0 0.0
  %409 = vmatmul.mubr.f32.gmra.mrb[0].mxu0 %v283
  %v410 = vpop.f32.mrb[0].mxu0
  %v411 = vadd.f32 %v217, %v410
  %v412 = vpop.f32.mrb[0].mxu0
  %413 = vmatprep.mubr.f32.mxu0 0.0
  %414 = vmatmul.mubr.f32.gmra.mrb[0].mxu0 %v286
  %v415 = vpop.f32.mrb[0].mxu0
  %v416 = vadd.f32 %v222, %v415
  %v417 = vpop.f32.mrb[0].mxu0
  %418 = vmatprep.mubr.f32.mxu0 0.0
  %419 = vmatmul.mubr.f32.gmra.mrb[0].mxu0 %v289
  %v420 = vpop.f32.mrb[0].mxu0
  %v421 = vadd.f32 %v227, %v420
  %v422 = vpop.f32.mrb[0].mxu0
  %423 = vmatprep.mubr.f32.mxu0 0.0
  %424 = vmatmul.mubr.f32.gmra.mrb[0].mxu0 %v292
  %v425 = vpop.f32.mrb[0].mxu0
  %v426 = vadd.f32 %v232, %v425
  %v427 = vpop.f32.mrb[0].mxu0
  %428 = vmatprep.mubr.f32.mxu0 0.0
  %429 = vmatmul.mubr.f32.gmra.mrb[0].mxu0 %v295
  %v430 = vpop.f32.mrb[0].mxu0
  %v431 = vadd.f32 %v237, %v430
  %v432 = vpop.f32.mrb[0].mxu0
  %433 = vmatprep.mubr.f32.mxu0 0.0
  %434 = vmatmul.mubr.f32.gmra.mrb[0].mxu0 %v298
  %v435 = vpop.f32.mrb[0].mxu0
  %v436 = vadd.f32 %v242, %v435
  %v437 = vpop.f32.mrb[0].mxu0
  %438 = vmatprep.mubr.f32.mxu0 0.0
  %439 = vmatmul.mubr.f32.gmra.mrb[0].mxu0 %v301
  %v440 = vpop.f32.mrb[0].mxu0
  %v441 = vadd.f32 %v247, %v440
  %v442 = vpop.f32.mrb[0].mxu0
  %443 = vmatprep.mubr.f32.mxu0 0.0
  %444 = vmatmul.mubr.f32.gmra.mrb[0].mxu0 %v304
  %v445 = vpop.f32.mrb[0].mxu0
  %v446 = vadd.f32 %v252, %v445
  %v447 = vpop.f32.mrb[0].mxu0
  %448 = vmatprep.mubr.f32.mxu0 0.0
  %449 = vmatmul.mubr.f32.gmra.mrb[0].mxu0 %v307
  %v450 = vpop.f32.mrb[0].mxu0
  %v451 = vadd.f32 %v257, %v450
  %v452 = vpop.f32.mrb[0].mxu0
  %453 = vdwg.mxu0
  %v454 = vlaneseq
  %v455 = vshrl.u32 %v454, 7
  %v456 = vsub.s32 0, %v455
  %v457 = vrot.slane %v55, %v456
  %v458 = vadd.f32 %v376, %v457
  %v459 = vadd.f32 %v381, %v457
  %v460 = vadd.f32 %v386, %v457
  %v461 = vadd.f32 %v391, %v457
  %v462 = vadd.f32 %v396, %v457
  %v463 = vadd.f32 %v401, %v457
  %v464 = vadd.f32 %v406, %v457
  %v465 = vadd.f32 %v411, %v457
  %v466 = vadd.f32 %v416, %v457
  %v467 = vadd.f32 %v421, %v457
  %v468 = vadd.f32 %v426, %v457
  %v469 = vadd.f32 %v431, %v457
  %v470 = vadd.f32 %v436, %v457
  %v471 = vadd.f32 %v441, %v457
  %v472 = vadd.f32 %v446, %v457
  %v473 = vadd.f32 %v451, %v457
  %v474 = vmax.f32 %v458, 0.0
  %v475 = vmax.f32 %v459, 0.0
  %v476 = vmax.f32 %v460, 0.0
  %v477 = vmax.f32 %v461, 0.0
  %v478 = vmax.f32 %v462, 0.0
  %v479 = vmax.f32 %v463, 0.0
  %v480 = vmax.f32 %v464, 0.0
  %v481 = vmax.f32 %v465, 0.0
  %v482 = vmax.f32 %v466, 0.0
  %v483 = vmax.f32 %v467, 0.0
  %v484 = vmax.f32 %v468, 0.0
  %v485 = vmax.f32 %v469, 0.0
  %v486 = vmax.f32 %v470, 0.0
  %v487 = vmax.f32 %v471, 0.0
  %v488 = vmax.f32 %v472, 0.0
  %v489 = vmax.f32 %v473, 0.0
  %v490 = vld [vmem:[%s4] sm:$0xff]
  %v491 = vld [vmem:[%s4 + $0x8] sm:$0xff]
  %v492 = vld [vmem:[%s4 + $0x10] sm:$0xff]
  %v493 = vld [vmem:[%s4 + $0x18] sm:$0xff]
  %v494 = vlaneseq
  %v495 = vshrl.u32 %v494, 7
  %v496 = vsub.s32 0, %v495
  %v497 = vrot.slane %v56, %v496
  %vm498 = vcmask 261120
  %v500 = vsel %vm498, %v474, 0
  %v503 = vsel %vm498, %v475, 0
  %v506 = vsel %vm498, %v476, 0
  %v509 = vsel %vm498, %v477, 0
  %v512 = vsel %vm498, %v478, 0
  %v515 = vsel %vm498, %v479, 0
  %v518 = vsel %vm498, %v480, 0
  %v521 = vsel %vm498, %v481, 0
  %v524 = vsel %vm498, %v482, 0
  %v527 = vsel %vm498, %v483, 0
  %v530 = vsel %vm498, %v484, 0
  %v533 = vsel %vm498, %v485, 0
  %v536 = vsel %vm498, %v486, 0
  %v539 = vsel %vm498, %v487, 0
  %v542 = vsel %vm498, %v488, 0
  %v545 = vsel %vm498, %v489, 0
  %547 = vmatprep.subr.mxu0 0.0
  %548 = vmatpush1.msra.mxu0 %v490
  %549 = vmatprep.subr.mxu0 0.0
  %550 = vmatpush1.msra.mxu0 %v491
  %551 = vmatprep.subr.mxu0 0.0
  %552 = vmatpush1.msra.mxu0 %v492
  %553 = vmatprep.subr.mxu0 0.0
  %554 = vmatpush1.msra.mxu0 %v493
  %555 = vmatprep.subr.mxu0 0.0
  %556 = vmatpush1.msra.mxu0 0.0
  %557 = vmatprep.subr.mxu0 0.0
  %558 = vmatpush1.msra.mxu0 0.0
  %559 = vmatprep.subr.mxu0 0.0
  %560 = vmatpush1.msra.mxu0 0.0
  %561 = vmatprep.subr.mxu0 0.0
  %562 = vmatpush1.msra.mxu0 0.0
  %563 = vmatprep.subr.mxu0 0.0
  %564 = vmatpush1.msra.mxu0 0.0
  %565 = vmatprep.subr.mxu0 0.0
  %566 = vmatpush1.msra.mxu0 0.0
  %567 = vmatprep.subr.mxu0 0.0
  %568 = vmatpush1.msra.mxu0 0.0
  %569 = vmatprep.subr.mxu0 0.0
  %570 = vmatpush1.msra.mxu0 0.0
  %571 = vmatprep.subr.mxu0 0.0
  %572 = vmatpush1.msra.mxu0 0.0
  %573 = vmatprep.subr.mxu0 0.0
  %574 = vmatpush1.msra.mxu0 0.0
  %575 = vmatprep.subr.mxu0 0.0
  %576 = vmatpush1.msra.mxu0 0.0
  %577 = vmatprep.subr.mxu0 0.0
  %578 = vmatpush1.msra.mxu0 0.0
  %579 = vmatprep.subr.mxu0 0.0
  %580 = vmatpush1.msra.mxu0 0.0
  %581 = vmatprep.subr.mxu0 0.0
  %582 = vmatpush1.msra.mxu0 0.0
  %583 = vmatprep.subr.mxu0 0.0
  %584 = vmatpush1.msra.mxu0 0.0
  %585 = vmatprep.subr.mxu0 0.0
  %586 = vmatpush1.msra.mxu0 0.0
  %587 = vmatprep.subr.mxu0 0.0
  %588 = vmatpush1.msra.mxu0 0.0
  %589 = vmatprep.subr.mxu0 0.0
  %590 = vmatpush1.msra.mxu0 0.0
  %591 = vmatprep.subr.mxu0 0.0
  %592 = vmatpush1.msra.mxu0 0.0
  %593 = vmatprep.subr.mxu0 0.0
  %594 = vmatpush1.msra.mxu0 0.0
  %595 = vmatprep.subr.mxu0 0.0
  %596 = vmatpush1.msra.mxu0 0.0
  %597 = vmatprep.subr.mxu0 0.0
  %598 = vmatpush1.msra.mxu0 0.0
  %599 = vmatprep.subr.mxu0 0.0
  %600 = vmatpush1.msra.mxu0 0.0
  %601 = vmatprep.subr.mxu0 0.0
  %602 = vmatpush1.msra.mxu0 0.0
  %603 = vmatprep.subr.mxu0 0.0
  %604 = vmatpush1.msra.mxu0 0.0
  %605 = vmatprep.subr.mxu0 0.0
  %606 = vmatpush1.msra.mxu0 0.0
  %607 = vmatprep.subr.mxu0 0.0
  %608 = vmatpush1.msra.mxu0 0.0
  %609 = vmatprep.subr.mxu0 0.0
  %610 = vmatpush1.msra.mxu0 0.0
  %611 = vmatprep.mubr.f32.mxu0 0.0
  %612 = vmatmul.mubr.f32.gmra.mrb[0].mxu0 %v500
  %v613 = vpop.f32.mrb[0].mxu0
  %v614 = vadd.f32 %v497, %v613
  %v615 = vpop.f32.mrb[0].mxu0
  %616 = vmatprep.mubr.f32.mxu0 0.0
  %617 = vmatmul.mubr.f32.gmra.mrb[0].mxu0 %v503
  %v618 = vpop.f32.mrb[0].mxu0
  %v619 = vadd.f32 %v497, %v618
  %v620 = vpop.f32.mrb[0].mxu0
  %621 = vmatprep.mubr.f32.mxu0 0.0
  %622 = vmatmul.mubr.f32.gmra.mrb[0].mxu0 %v506
  %v623 = vpop.f32.mrb[0].mxu0
  %v624 = vadd.f32 %v497, %v623
  %v625 = vpop.f32.mrb[0].mxu0
  %626 = vmatprep.mubr.f32.mxu0 0.0
  %627 = vmatmul.mubr.f32.gmra.mrb[0].mxu0 %v509
  %v628 = vpop.f32.mrb[0].mxu0
  %v629 = vadd.f32 %v497, %v628
  %v630 = vpop.f32.mrb[0].mxu0
  %631 = vmatprep.mubr.f32.mxu0 0.0
  %632 = vmatmul.mubr.f32.gmra.mrb[0].mxu0 %v512
  %v633 = vpop.f32.mrb[0].mxu0
  %v634 = vadd.f32 %v497, %v633
  %v635 = vpop.f32.mrb[0].mxu0
  %636 = vmatprep.mubr.f32.mxu0 0.0
  %637 = vmatmul.mubr.f32.gmra.mrb[0].mxu0 %v515
  %v638 = vpop.f32.mrb[0].mxu0
  %v639 = vadd.f32 %v497, %v638
  %v640 = vpop.f32.mrb[0].mxu0
  %641 = vmatprep.mubr.f32.mxu0 0.0
  %642 = vmatmul.mubr.f32.gmra.mrb[0].mxu0 %v518
  %v643 = vpop.f32.mrb[0].mxu0
  %v644 = vadd.f32 %v497, %v643
  %v645 = vpop.f32.mrb[0].mxu0
  %646 = vmatprep.mubr.f32.mxu0 0.0
  %647 = vmatmul.mubr.f32.gmra.mrb[0].mxu0 %v521
  %v648 = vpop.f32.mrb[0].mxu0
  %v649 = vadd.f32 %v497, %v648
  %v650 = vpop.f32.mrb[0].mxu0
  %651 = vmatprep.mubr.f32.mxu0 0.0
  %652 = vmatmul.mubr.f32.gmra.mrb[0].mxu0 %v524
  %v653 = vpop.f32.mrb[0].mxu0
  %v654 = vadd.f32 %v497, %v653
  %v655 = vpop.f32.mrb[0].mxu0
  %656 = vmatprep.mubr.f32.mxu0 0.0
  %657 = vmatmul.mubr.f32.gmra.mrb[0].mxu0 %v527
  %v658 = vpop.f32.mrb[0].mxu0
  %v659 = vadd.f32 %v497, %v658
  %v660 = vpop.f32.mrb[0].mxu0
  %661 = vmatprep.mubr.f32.mxu0 0.0
  %662 = vmatmul.mubr.f32.gmra.mrb[0].mxu0 %v530
  %v663 = vpop.f32.mrb[0].mxu0
  %v664 = vadd.f32 %v497, %v663
  %v665 = vpop.f32.mrb[0].mxu0
  %666 = vmatprep.mubr.f32.mxu0 0.0
  %667 = vmatmul.mubr.f32.gmra.mrb[0].mxu0 %v533
  %v668 = vpop.f32.mrb[0].mxu0
  %v669 = vadd.f32 %v497, %v668
  %v670 = vpop.f32.mrb[0].mxu0
  %671 = vmatprep.mubr.f32.mxu0 0.0
  %672 = vmatmul.mubr.f32.gmra.mrb[0].mxu0 %v536
  %v673 = vpop.f32.mrb[0].mxu0
  %v674 = vadd.f32 %v497, %v673
  %v675 = vpop.f32.mrb[0].mxu0
  %676 = vmatprep.mubr.f32.mxu0 0.0
  %677 = vmatmul.mubr.f32.gmra.mrb[0].mxu0 %v539
  %v678 = vpop.f32.mrb[0].mxu0
  %v679 = vadd.f32 %v497, %v678
  %v680 = vpop.f32.mrb[0].mxu0
  %681 = vmatprep.mubr.f32.mxu0 0.0
  %682 = vmatmul.mubr.f32.gmra.mrb[0].mxu0 %v542
  %v683 = vpop.f32.mrb[0].mxu0
  %v684 = vadd.f32 %v497, %v683
  %v685 = vpop.f32.mrb[0].mxu0
  %686 = vmatprep.mubr.f32.mxu0 0.0
  %687 = vmatmul.mubr.f32.gmra.mrb[0].mxu0 %v545
  %v688 = vpop.f32.mrb[0].mxu0
  %v689 = vadd.f32 %v497, %v688
  %v690 = vpop.f32.mrb[0].mxu0
  %691 = vdwg.mxu0
  %v692 = vmax.f32 %v614, 0.0
  %v693 = vmax.f32 %v619, 0.0
  %v694 = vmax.f32 %v624, 0.0
  %v695 = vmax.f32 %v629, 0.0
  %v696 = vmax.f32 %v634, 0.0
  %v697 = vmax.f32 %v639, 0.0
  %v698 = vmax.f32 %v644, 0.0
  %v699 = vmax.f32 %v649, 0.0
  %v700 = vmax.f32 %v654, 0.0
  %v701 = vmax.f32 %v659, 0.0
  %v702 = vmax.f32 %v664, 0.0
  %v703 = vmax.f32 %v669, 0.0
  %v704 = vmax.f32 %v674, 0.0
  %v705 = vmax.f32 %v679, 0.0
  %v706 = vmax.f32 %v684, 0.0
  %v707 = vmax.f32 %v689, 0.0
  %s708 = scalar_lea.vmem %s4, 32
  %v709 = vld [vmem:[%s708] sm:$0xff]
  %v710 = vld [vmem:[%s708 + $0x8] sm:$0xff]
  %v711 = vld [vmem:[%s708 + $0x10] sm:$0xff]
  %v712 = vld [vmem:[%s708 + $0x18] sm:$0xff]
  %v713 = vlaneseq
  %v714 = vshrl.u32 %v713, 7
  %v715 = vsub.s32 0, %v714
  %v716 = vrot.slane %v57, %v715
  %v718 = vsel %vm498, %v692, 0
  %v721 = vsel %vm498, %v693, 0
  %v724 = vsel %vm498, %v694, 0
  %v727 = vsel %vm498, %v695, 0
  %v730 = vsel %vm498, %v696, 0
  %v733 = vsel %vm498, %v697, 0
  %v736 = vsel %vm498, %v698, 0
  %v739 = vsel %vm498, %v699, 0
  %v742 = vsel %vm498, %v700, 0
  %v745 = vsel %vm498, %v701, 0
  %v748 = vsel %vm498, %v702, 0
  %v751 = vsel %vm498, %v703, 0
  %v754 = vsel %vm498, %v704, 0
  %v757 = vsel %vm498, %v705, 0
  %v760 = vsel %vm498, %v706, 0
  %v763 = vsel %vm498, %v707, 0
  %765 = vmatprep.subr.mxu0 0.0
  %766 = vmatpush1.msra.mxu0 %v709
  %767 = vmatprep.subr.mxu0 0.0
  %768 = vmatpush1.msra.mxu0 %v710
  %769 = vmatprep.subr.mxu0 0.0
  %770 = vmatpush1.msra.mxu0 %v711
  %771 = vmatprep.subr.mxu0 0.0
  %772 = vmatpush1.msra.mxu0 %v712
  %773 = vmatprep.subr.mxu0 0.0
  %774 = vmatpush1.msra.mxu0 0.0
  %775 = vmatprep.subr.mxu0 0.0
  %776 = vmatpush1.msra.mxu0 0.0
  %777 = vmatprep.subr.mxu0 0.0
  %778 = vmatpush1.msra.mxu0 0.0
  %779 = vmatprep.subr.mxu0 0.0
  %780 = vmatpush1.msra.mxu0 0.0
  %781 = vmatprep.subr.mxu0 0.0
  %782 = vmatpush1.msra.mxu0 0.0
  %783 = vmatprep.subr.mxu0 0.0
  %784 = vmatpush1.msra.mxu0 0.0
  %785 = vmatprep.subr.mxu0 0.0
  %786 = vmatpush1.msra.mxu0 0.0
  %787 = vmatprep.subr.mxu0 0.0
  %788 = vmatpush1.msra.mxu0 0.0
  %789 = vmatprep.subr.mxu0 0.0
  %790 = vmatpush1.msra.mxu0 0.0
  %791 = vmatprep.subr.mxu0 0.0
  %792 = vmatpush1.msra.mxu0 0.0
  %793 = vmatprep.subr.mxu0 0.0
  %794 = vmatpush1.msra.mxu0 0.0
  %795 = vmatprep.subr.mxu0 0.0
  %796 = vmatpush1.msra.mxu0 0.0
  %797 = vmatprep.subr.mxu0 0.0
  %798 = vmatpush1.msra.mxu0 0.0
  %799 = vmatprep.subr.mxu0 0.0
  %800 = vmatpush1.msra.mxu0 0.0
  %801 = vmatprep.subr.mxu0 0.0
  %802 = vmatpush1.msra.mxu0 0.0
  %803 = vmatprep.subr.mxu0 0.0
  %804 = vmatpush1.msra.mxu0 0.0
  %805 = vmatprep.subr.mxu0 0.0
  %806 = vmatpush1.msra.mxu0 0.0
  %807 = vmatprep.subr.mxu0 0.0
  %808 = vmatpush1.msra.mxu0 0.0
  %809 = vmatprep.subr.mxu0 0.0
  %810 = vmatpush1.msra.mxu0 0.0
  %811 = vmatprep.subr.mxu0 0.0
  %812 = vmatpush1.msra.mxu0 0.0
  %813 = vmatprep.subr.mxu0 0.0
  %814 = vmatpush1.msra.mxu0 0.0
  %815 = vmatprep.subr.mxu0 0.0
  %816 = vmatpush1.msra.mxu0 0.0
  %817 = vmatprep.subr.mxu0 0.0
  %818 = vmatpush1.msra.mxu0 0.0
  %819 = vmatprep.subr.mxu0 0.0
  %820 = vmatpush1.msra.mxu0 0.0
  %821 = vmatprep.subr.mxu0 0.0
  %822 = vmatpush1.msra.mxu0 0.0
  %823 = vmatprep.subr.mxu0 0.0
  %824 = vmatpush1.msra.mxu0 0.0
  %825 = vmatprep.subr.mxu0 0.0
  %826 = vmatpush1.msra.mxu0 0.0
  %827 = vmatprep.subr.mxu0 0.0
  %828 = vmatpush1.msra.mxu0 0.0
  %829 = vmatprep.mubr.f32.mxu0 0.0
  %830 = vmatmul.mubr.f32.gmra.mrb[0].mxu0 %v718
  %v831 = vpop.f32.mrb[0].mxu0
  %v832 = vadd.f32 %v716, %v831
  %v833 = vpop.f32.mrb[0].mxu0
  %834 = vmatprep.mubr.f32.mxu0 0.0
  %835 = vmatmul.mubr.f32.gmra.mrb[0].mxu0 %v721
  %v836 = vpop.f32.mrb[0].mxu0
  %v837 = vadd.f32 %v716, %v836
  %v838 = vpop.f32.mrb[0].mxu0
  %839 = vmatprep.mubr.f32.mxu0 0.0
  %840 = vmatmul.mubr.f32.gmra.mrb[0].mxu0 %v724
  %v841 = vpop.f32.mrb[0].mxu0
  %v842 = vadd.f32 %v716, %v841
  %v843 = vpop.f32.mrb[0].mxu0
  %844 = vmatprep.mubr.f32.mxu0 0.0
  %845 = vmatmul.mubr.f32.gmra.mrb[0].mxu0 %v727
  %v846 = vpop.f32.mrb[0].mxu0
  %v847 = vadd.f32 %v716, %v846
  %v848 = vpop.f32.mrb[0].mxu0
  %849 = vmatprep.mubr.f32.mxu0 0.0
  %850 = vmatmul.mubr.f32.gmra.mrb[0].mxu0 %v730
  %v851 = vpop.f32.mrb[0].mxu0
  %v852 = vadd.f32 %v716, %v851
  %v853 = vpop.f32.mrb[0].mxu0
  %854 = vmatprep.mubr.f32.mxu0 0.0
  %855 = vmatmul.mubr.f32.gmra.mrb[0].mxu0 %v733
  %v856 = vpop.f32.mrb[0].mxu0
  %v857 = vadd.f32 %v716, %v856
  %v858 = vpop.f32.mrb[0].mxu0
  %859 = vmatprep.mubr.f32.mxu0 0.0
  %860 = vmatmul.mubr.f32.gmra.mrb[0].mxu0 %v736
  %v861 = vpop.f32.mrb[0].mxu0
  %v862 = vadd.f32 %v716, %v861
  %v863 = vpop.f32.mrb[0].mxu0
  %864 = vmatprep.mubr.f32.mxu0 0.0
  %865 = vmatmul.mubr.f32.gmra.mrb[0].mxu0 %v739
  %v866 = vpop.f32.mrb[0].mxu0
  %v867 = vadd.f32 %v716, %v866
  %v868 = vpop.f32.mrb[0].mxu0
  %869 = vmatprep.mubr.f32.mxu0 0.0
  %870 = vmatmul.mubr.f32.gmra.mrb[0].mxu0 %v742
  %v871 = vpop.f32.mrb[0].mxu0
  %v872 = vadd.f32 %v716, %v871
  %v873 = vpop.f32.mrb[0].mxu0
  %874 = vmatprep.mubr.f32.mxu0 0.0
  %875 = vmatmul.mubr.f32.gmra.mrb[0].mxu0 %v745
  %v876 = vpop.f32.mrb[0].mxu0
  %v877 = vadd.f32 %v716, %v876
  %v878 = vpop.f32.mrb[0].mxu0
  %879 = vmatprep.mubr.f32.mxu0 0.0
  %880 = vmatmul.mubr.f32.gmra.mrb[0].mxu0 %v748
  %v881 = vpop.f32.mrb[0].mxu0
  %v882 = vadd.f32 %v716, %v881
  %v883 = vpop.f32.mrb[0].mxu0
  %884 = vmatprep.mubr.f32.mxu0 0.0
  %885 = vmatmul.mubr.f32.gmra.mrb[0].mxu0 %v751
  %v886 = vpop.f32.mrb[0].mxu0
  %v887 = vadd.f32 %v716, %v886
  %v888 = vpop.f32.mrb[0].mxu0
  %889 = vmatprep.mubr.f32.mxu0 0.0
  %890 = vmatmul.mubr.f32.gmra.mrb[0].mxu0 %v754
  %v891 = vpop.f32.mrb[0].mxu0
  %v892 = vadd.f32 %v716, %v891
  %v893 = vpop.f32.mrb[0].mxu0
  %894 = vmatprep.mubr.f32.mxu0 0.0
  %895 = vmatmul.mubr.f32.gmra.mrb[0].mxu0 %v757
  %v896 = vpop.f32.mrb[0].mxu0
  %v897 = vadd.f32 %v716, %v896
  %v898 = vpop.f32.mrb[0].mxu0
  %899 = vmatprep.mubr.f32.mxu0 0.0
  %900 = vmatmul.mubr.f32.gmra.mrb[0].mxu0 %v760
  %v901 = vpop.f32.mrb[0].mxu0
  %v902 = vadd.f32 %v716, %v901
  %v903 = vpop.f32.mrb[0].mxu0
  %904 = vmatprep.mubr.f32.mxu0 0.0
  %905 = vmatmul.mubr.f32.gmra.mrb[0].mxu0 %v763
  %v906 = vpop.f32.mrb[0].mxu0
  %v907 = vadd.f32 %v716, %v906
  %v908 = vpop.f32.mrb[0].mxu0
  %909 = vdwg.mxu0
  %v910 = vmax.f32 %v832, 0.0
  %v911 = vmax.f32 %v837, 0.0
  %v912 = vmax.f32 %v842, 0.0
  %v913 = vmax.f32 %v847, 0.0
  %v914 = vmax.f32 %v852, 0.0
  %v915 = vmax.f32 %v857, 0.0
  %v916 = vmax.f32 %v862, 0.0
  %v917 = vmax.f32 %v867, 0.0
  %v918 = vmax.f32 %v872, 0.0
  %v919 = vmax.f32 %v877, 0.0
  %v920 = vmax.f32 %v882, 0.0
  %v921 = vmax.f32 %v887, 0.0
  %v922 = vmax.f32 %v892, 0.0
  %v923 = vmax.f32 %v897, 0.0
  %v924 = vmax.f32 %v902, 0.0
  %v925 = vmax.f32 %v907, 0.0
  %927 = vset.pattern.permute.xlu0 0
  %928 = vperm.xlu0 %927, %v59
  %v929 = vpop.permute.xlu0 %928
  %v932 = vsel %vm498, %v58, 0
  %v935 = vsel %vm498, %v910, 0
  %v938 = vsel %vm498, %v911, 0
  %v941 = vsel %vm498, %v912, 0
  %v944 = vsel %vm498, %v913, 0
  %v947 = vsel %vm498, %v914, 0
  %v950 = vsel %vm498, %v915, 0
  %v953 = vsel %vm498, %v916, 0
  %v956 = vsel %vm498, %v917, 0
  %v959 = vsel %vm498, %v918, 0
  %v962 = vsel %vm498, %v919, 0
  %v965 = vsel %vm498, %v920, 0
  %v968 = vsel %vm498, %v921, 0
  %v971 = vsel %vm498, %v922, 0
  %v974 = vsel %vm498, %v923, 0
  %v977 = vsel %vm498, %v924, 0
  %v980 = vsel %vm498, %v925, 0
  %982 = vmatprep.subr.mxu0 0.0
  %983 = vmatpush1.xpose.msra.mxu0 %v935
  %984 = vmatprep.subr.mxu0 0.0
  %985 = vmatpush1.xpose.msra.mxu0 %v938
  %986 = vmatprep.subr.mxu0 0.0
  %987 = vmatpush1.xpose.msra.mxu0 %v941
  %988 = vmatprep.subr.mxu0 0.0
  %989 = vmatpush1.xpose.msra.mxu0 %v944
  %990 = vmatprep.subr.mxu0 0.0
  %991 = vmatpush1.xpose.msra.mxu0 %v947
  %992 = vmatprep.subr.mxu0 0.0
  %993 = vmatpush1.xpose.msra.mxu0 %v950
  %994 = vmatprep.subr.mxu0 0.0
  %995 = vmatpush1.xpose.msra.mxu0 %v953
  %996 = vmatprep.subr.mxu0 0.0
  %997 = vmatpush1.xpose.msra.mxu0 %v956
  %998 = vmatprep.subr.mxu0 0.0
  %999 = vmatpush1.xpose.msra.mxu0 %v959
  %1000 = vmatprep.subr.mxu0 0.0
  %1001 = vmatpush1.xpose.msra.mxu0 %v962
  %1002 = vmatprep.subr.mxu0 0.0
  %1003 = vmatpush1.xpose.msra.mxu0 %v965
  %1004 = vmatprep.subr.mxu0 0.0
  %1005 = vmatpush1.xpose.msra.mxu0 %v968
  %1006 = vmatprep.subr.mxu0 0.0
  %1007 = vmatpush1.xpose.msra.mxu0 %v971
  %1008 = vmatprep.subr.mxu0 0.0
  %1009 = vmatpush1.xpose.msra.mxu0 %v974
  %1010 = vmatprep.subr.mxu0 0.0
  %1011 = vmatpush1.xpose.msra.mxu0 %v977
  %1012 = vmatprep.subr.mxu0 0.0
  %1013 = vmatpush1.xpose.msra.mxu0 %v980
  %1014 = vmatprep.subr.mxu0 0.0
  %1015 = vmatpush1.xpose.msra.mxu0 0.0
  %1016 = vmatprep.subr.mxu0 0.0
  %1017 = vmatpush1.xpose.msra.mxu0 0.0
  %1018 = vmatprep.subr.mxu0 0.0
  %1019 = vmatpush1.xpose.msra.mxu0 0.0
  %1020 = vmatprep.subr.mxu0 0.0
  %1021 = vmatpush1.xpose.msra.mxu0 0.0
  %1022 = vmatprep.subr.mxu0 0.0
  %1023 = vmatpush1.xpose.msra.mxu0 0.0
  %1024 = vmatprep.subr.mxu0 0.0
  %1025 = vmatpush1.xpose.msra.mxu0 0.0
  %1026 = vmatprep.subr.mxu0 0.0
  %1027 = vmatpush1.xpose.msra.mxu0 0.0
  %1028 = vmatprep.subr.mxu0 0.0
  %1029 = vmatpush1.xpose.msra.mxu0 0.0
  %1030 = vmatprep.subr.mxu0 0.0
  %1031 = vmatpush1.xpose.msra.mxu0 0.0
  %1032 = vmatprep.subr.mxu0 0.0
  %1033 = vmatpush1.xpose.msra.mxu0 0.0
  %1034 = vmatprep.subr.mxu0 0.0
  %1035 = vmatpush1.xpose.msra.mxu0 0.0
  %1036 = vmatprep.subr.mxu0 0.0
  %1037 = vmatpush1.xpose.msra.mxu0 0.0
  %1038 = vmatprep.subr.mxu0 0.0
  %1039 = vmatpush1.xpose.msra.mxu0 0.0
  %1040 = vmatprep.subr.mxu0 0.0
  %1041 = vmatpush1.xpose.msra.mxu0 0.0
  %1042 = vmatprep.subr.mxu0 0.0
  %1043 = vmatpush1.xpose.msra.mxu0 0.0
  %1044 = vmatprep.subr.mxu0 0.0
  %1045 = vmatpush1.xpose.msra.mxu0 0.0
  %1046 = vmatprep.mubr.f32.mxu0 0.0
  %1047 = vmatmul.mubr.f32.gmra.mrb[0].mxu0 %v932
  %v1048 = vpop.f32.mrb[0].mxu0
  %v1049 = vadd.f32 %v929, %v1048
  %v1050 = vpop.f32.mrb[0].mxu0
  %1051 = vdwg.mxu0
  %1052 = vst [vmem:[%s6] sm:$0x1] %v1049
  // Predicated region
  $region26: #{critic_forward.1} parent=0 // pred_check
    _
  $region27: #{critic_forward.1} parent=0 // pred_check_branch
    %1054 = sbr.rel (0) target = $region29
  $region28: #{critic_forward.1} parent=0 // pred_region
    _
  $region29: #{critic_forward.1} parent=0 // pred_fallthru
    _
  // Predicated region
  $region30: #{critic_forward.1} parent=0 // pred_check
    _
  $region31: #{critic_forward.1} parent=0 // pred_check_branch
    %1056 = sbr.rel (0) target = $region33
  $region32: #{critic_forward.1} parent=0 // pred_region
    _
  $region33: #{critic_forward.1} parent=0 // pred_fallthru
    _

</llo_original>
